<compile_context>
chip_gen: v6e
topology: v6e:2x2x1
jax: 0.10.0
libtpu: 0.0.40
codegen_flags: <defaults>
</compile_context>

<pallas_src>
import jax
import jax.numpy as jnp
from jax.experimental import pallas as pl
from jax.experimental.pallas import tpu as pltpu


def _round_up(x, m):
    return ((x + m - 1) // m) * m


def _vmem_capacity_bytes():
    try:
        return int(pltpu.get_tpu_info().vmem_capacity_bytes)
    except Exception:
        return 64 * 1024 * 1024  # conservative (v7x-sized) fallback


def _choose_tiles(B, Q, K, H, Dq, Dk, Dv, itemsize, vmem_limit_bytes,
                  chunk_budget_bytes):
    # --- Q tile: full Q when small, otherwise 256 (multiple of 8) ---
    bq = Q if Q <= 512 else 256
    Q_pad = _round_up(Q, bq)

    # --- K tile: minimize padding, keep it sublane-aligned ---
    if K <= 512:
        bk = _round_up(K, 8)
    else:
        bk = min((512, 256, 128), key=lambda c: _round_up(K, c) - K)
    K_pad = _round_up(K, bk)

    # --- batch tile from the per-generation VMEM budget ---
    budget = max(vmem_limit_bytes // 2, 1)
    per_b = ((2 * (bq * Dq + bk * (Dk + Dv)) + 2 * bq * Dv) * itemsize  # dbl-buf I/O
             + (bq * H + 2 * bq + bq * Dv + 8 * bk * H) * 4)            # scratch + chunk
    bb = max(1, min(B, budget // max(per_b, 1)))
    # Keep >= 2 parallel grid steps when possible so v7x's two TensorCores
    # both get work (harmless elsewhere; only triggers when Q is a single tile).
    n_q_tiles = Q_pad // bq
    if n_q_tiles == 1 and B >= 2:
        bb = min(bb, max(1, (B + 1) // 2))
    B_pad = _round_up(B, bb)

    # --- inner q-chunk rows: keep the tanh intermediate small ---
    cands = [c for c in range(8, bq + 1, 8) if bq % c == 0]
    if not cands:
        cq = bq
    else:
        cq = cands[0]
        for c in cands:
            if bb * c * bk * H * 4 <= chunk_budget_bytes:
                cq = c
    return bb, bq, bk, cq, B_pad, Q_pad, K_pad


def _make_kernel(*, bb, bq, bk, cq, H, Dq, Dk, Dv, K_true, mask_needed,
                 feature_dtype, flatten_out):
    n_chunks = bq // cq
    use_bf16_pv = jnp.dtype(feature_dtype) == jnp.dtype(jnp.bfloat16)

    def kernel(q_ref, k_ref, v_ref, wqT_ref, wkT_ref, wv_ref, o_ref,
               qp_ref, m_ref, l_ref, acc_ref):
        kt = pl.program_id(2)

        # ---- init (first K tile): cache q-projection, reset running stats ----
        @pl.when(kt == 0)
        def _init():
            q2 = q_ref[...].reshape(bb * bq, Dq)
            qp = jnp.dot(q2, wqT_ref[...], preferred_element_type=jnp.float32)
            qp_ref[...] = qp.reshape(bb, bq, H)
            m_ref[...] = jnp.full(m_ref.shape, -jnp.inf, dtype=jnp.float32)
            l_ref[...] = jnp.zeros(l_ref.shape, dtype=jnp.float32)
            acc_ref[...] = jnp.zeros(acc_ref.shape, dtype=jnp.float32)

        # ---- key projection for this K tile (MXU, f32 accumulation) ----
        k2 = k_ref[...].reshape(bb * bk, Dk)
        kp = jnp.dot(k2, wkT_ref[...], preferred_element_type=jnp.float32)
        kp = kp.reshape(bb, bk, H).astype(feature_dtype)

        wv = wv_ref[...].reshape(1, 1, 1, H).astype(feature_dtype)
        v_tile = v_ref[...]
        pv_dtype = jnp.bfloat16 if use_bf16_pv else v_tile.dtype

        # Per-tile padding bias (one bk-length vector, outside the hot loop).
        if mask_needed:
            k_idx = kt * bk + jax.lax.broadcasted_iota(jnp.int32, (1, 1, bk), 2)
            bias = jnp.where(k_idx < K_true, 0.0, -jnp.inf).astype(jnp.float32)

        # ---- additive features + tanh, processed in small query chunks so the
        #      (bb, cq, bk, H) intermediate never dominates VMEM/vst traffic ----
        def q_chunk(i):
            if isinstance(i, int):
                qs = i * cq                      # static slice (fully unrolled path)
            else:
                qs = pl.multiple_of(i * cq, cq)  # dynamic, sublane-aligned
            qp_c = qp_ref[:, pl.ds(qs, cq), :].astype(feature_dtype)      # (bb,cq,H)
            feats = jnp.tanh(qp_c[:, :, None, :] + kp[:, None, :, :])     # (bb,cq,bk,H)
            scores = jnp.sum(feats * wv, axis=-1, dtype=jnp.float32)      # (bb,cq,bk)
            if mask_needed:
                scores = scores + bias

            # Online (flash-style) softmax update for these query rows.
            m_prev = m_ref[:, pl.ds(qs, cq), :]
            l_prev = l_ref[:, pl.ds(qs, cq), :]
            a_prev = acc_ref[:, pl.ds(qs, cq), :]
            m_new = jnp.maximum(m_prev, jnp.max(scores, axis=-1, keepdims=True))
            alpha = jnp.exp(m_prev - m_new)
            p = jnp.exp(scores - m_new)
            l_ref[:, pl.ds(qs, cq), :] = alpha * l_prev + jnp.sum(
                p, axis=-1, keepdims=True)
            acc_ref[:, pl.ds(qs, cq), :] = alpha * a_prev + jnp.einsum(
                "bqk,bkd->bqd", p.astype(pv_dtype), v_tile.astype(pv_dtype),
                preferred_element_type=jnp.float32)
            m_ref[:, pl.ds(qs, cq), :] = m_new

        if n_chunks <= 8:
            for i in range(n_chunks):
                q_chunk(i)
        else:
            def body(i, carry):
                q_chunk(i)
                return carry
            jax.lax.fori_loop(0, n_chunks, body, 0)

        # ---- finalize on the last K tile (exact softmax normalization) ----
        @pl.when(kt == pl.num_programs(2) - 1)
        def _finalize():
            out = acc_ref[...] / l_ref[...]
            if flatten_out:
                o_ref[...] = out.reshape(bb, bq * Dv).astype(o_ref.dtype)
            else:
                o_ref[...] = out.astype(o_ref.dtype)

    return kernel


def additive_attention(queries, keys, values, W_q, W_k, w_v, *,
                       feature_dtype=jnp.float32,
                       chunk_budget_bytes=512 * 1024):
    """queries (B,Q,Dq), keys (B,K,Dk), values (B,K,Dv);
    W_q (H,Dq), W_k (H,Dk), w_v (1,H) — PyTorch nn.Linear weight shapes.
    feature_dtype=jnp.bfloat16 runs the tanh/feature path in bf16 (v6e/v7x)."""
    B, Q, Dq = queries.shape
    _, K, Dk = keys.shape
    _, _, Dv = values.shape
    H = W_q.shape[0]

    vmem_limit = int(_vmem_capacity_bytes() * 3 // 4)
    bb, bq, bk, cq, B_pad, Q_pad, K_pad = _choose_tiles(
        B, Q, K, H, Dq, Dk, Dv, queries.dtype.itemsize, vmem_limit,
        chunk_budget_bytes)
    mask_needed = K_pad != K

    if B_pad != B or Q_pad != Q:
        queries = jnp.pad(queries, ((0, B_pad - B), (0, Q_pad - Q), (0, 0)))
    if B_pad != B or K_pad != K:
        keys = jnp.pad(keys, ((0, B_pad - B), (0, K_pad - K), (0, 0)))
        values = jnp.pad(values, ((0, B_pad - B), (0, K_pad - K), (0, 0)))

    wqT = W_q.T                   # (Dq, H)
    wkT = W_k.T                   # (Dk, H)
    wv_row = w_v.reshape(1, H)    # (1, H) — applied on the VPU, not the MXU

    # Lane-dense output slab when Dv is narrow and the block stays legal.
    flatten_out = (Dv < 128 and (bq * Dv) % 128 == 0
                   and (bb % 8 == 0 or bb == B_pad))

    kernel = _make_kernel(bb=bb, bq=bq, bk=bk, cq=cq, H=H, Dq=Dq, Dk=Dk, Dv=Dv,
                          K_true=K, mask_needed=mask_needed,
                          feature_dtype=feature_dtype, flatten_out=flatten_out)

    grid = (B_pad // bb, Q_pad // bq, K_pad // bk)
    in_specs = [
        pl.BlockSpec((bb, bq, Dq), lambda b, q, k: (b, q, 0)),
        pl.BlockSpec((bb, bk, Dk), lambda b, q, k: (b, k, 0)),
        pl.BlockSpec((bb, bk, Dv), lambda b, q, k: (b, k, 0)),
        pl.BlockSpec((Dq, H), lambda b, q, k: (0, 0)),
        pl.BlockSpec((Dk, H), lambda b, q, k: (0, 0)),
        pl.BlockSpec((1, H), lambda b, q, k: (0, 0)),
    ]
    if flatten_out:
        out_shape = jax.ShapeDtypeStruct((B_pad, Q_pad * Dv), queries.dtype)
        out_spec = pl.BlockSpec((bb, bq * Dv), lambda b, q, k: (b, q))
    else:
        out_shape = jax.ShapeDtypeStruct((B_pad, Q_pad, Dv), queries.dtype)
        out_spec = pl.BlockSpec((bb, bq, Dv), lambda b, q, k: (b, q, 0))

    scratch_shapes = [
        pltpu.VMEM((bb, bq, H), jnp.float32),   # cached q-projection
        pltpu.VMEM((bb, bq, 1), jnp.float32),   # running max
        pltpu.VMEM((bb, bq, 1), jnp.float32),   # running denominator
        pltpu.VMEM((bb, bq, Dv), jnp.float32),  # running output accumulator
    ]

    itemsize = queries.dtype.itemsize
    flops = (2 * B * H * (Q * Dq + K * Dk)      # projections
             + 3 * B * Q * K * H                # add + w_v mul + reduce
             + 2 * B * Q * K * Dv)              # P @ V
    transcendentals = B * Q * K * H + 2 * B * Q * K   # tanh + exp
    bytes_accessed = itemsize * (B * Q * Dq + B * K * (Dk + Dv)
                                 + (Dq + Dk + 1) * H + B * Q * Dv)

    out = pl.pallas_call(
        kernel,
        out_shape=out_shape,
        grid_spec=pltpu.PrefetchScalarGridSpec(
            num_scalar_prefetch=0,
            grid=grid,                           # K (reduction) axis last
            in_specs=in_specs,
            out_specs=out_spec,
            scratch_shapes=scratch_shapes,
        ),
        compiler_params=pltpu.CompilerParams(
            dimension_semantics=("parallel", "parallel", "arbitrary"),
            vmem_limit_bytes=vmem_limit,
        ),
        cost_estimate=pl.CostEstimate(
            flops=int(flops),
            transcendentals=int(transcendentals),
            bytes_accessed=int(bytes_accessed),
        ),
    )(queries, keys, values, wqT, wkT, wv_row)

    if flatten_out:
        out = out.reshape(B_pad, Q_pad, Dv)
    return out[:B, :Q]


def additive_attention_ref(queries, keys, values, W_q, W_k, w_v):
    q_proj = queries @ W_q.T                         # (B, Q, H)
    k_proj = keys @ W_k.T                            # (B, K, H)
    feats = jnp.tanh(q_proj[:, :, None, :] + k_proj[:, None, :, :])
    scores = (feats @ w_v.reshape(-1, 1))[..., 0]    # (B, Q, K)
    attn = jax.nn.softmax(scores, axis=-1)
    return jnp.einsum("bqk,bkv->bqv", attn, values)


if __name__ == "__main__":
    def run_case(B, Q, K, Dq, Dk, H, Dv, feature_dtype, tol,
                 chunk_budget=512 * 1024, seed=0):
        key = jax.random.PRNGKey(seed)
        k0, k1, k2, k3, k4, k5 = jax.random.split(key, 6)
        queries = jax.random.normal(k0, (B, Q, Dq), dtype=jnp.float32)
        keys = jax.random.normal(k1, (B, K, Dk), dtype=jnp.float32)
        values = jax.random.normal(k2, (B, K, Dv), dtype=jnp.float32)
        # Deterministic parameter init (nn.Linear weight shapes: (out, in)).
        W_q = 0.1 * jax.random.normal(k3, (H, Dq), dtype=jnp.float32)
        W_k = 0.1 * jax.random.normal(k4, (H, Dk), dtype=jnp.float32)
        w_v = 0.1 * jax.random.normal(k5, (1, H), dtype=jnp.float32)

        out = additive_attention(queries, keys, values, W_q, W_k, w_v,
                                 feature_dtype=feature_dtype,
                                 chunk_budget_bytes=chunk_budget)
        out = jax.block_until_ready(out)
        ref = additive_attention_ref(queries, keys, values, W_q, W_k, w_v)
        assert out.shape == (B, Q, Dv)
        err = float(jnp.max(jnp.abs(out.astype(jnp.float32) - ref)))
        assert err <= tol, f"max err {err} > tol {tol}"

    # Case 1: original small config, exact f32 feature path (tight tolerance).
    run_case(B=2, Q=8, K=8, Dq=16, Dk=16, H=32, Dv=16,
             feature_dtype=jnp.float32, tol=1e-3)
    # Case 2: K padding + masking, chunked q loop, lane-dense flattened output.
    run_case(B=1, Q=16, K=20, Dq=8, Dk=8, H=16, Dv=8,
             feature_dtype=jnp.float32, tol=1e-3, chunk_budget=1024)
    # Case 3: bf16 feature/tanh path (v6e/v7x EUP optimization) — looser tol.
    run_case(B=2, Q=8, K=8, Dq=16, Dk=16, H=32, Dv=16,
             feature_dtype=jnp.bfloat16, tol=5e-2)

    print("KERNEL_OK")
</pallas_src>

<mosaic_0001>
module attributes {stable_mosaic.version = 11 : i64} {
  func.func @kernel(%arg0: i32, %arg1: i32, %arg2: i32, %arg3: memref<1x8x16xf32, #tpu.memory_space<vmem>>, %arg4: memref<1x8x16xf32, #tpu.memory_space<vmem>>, %arg5: memref<1x8x16xf32, #tpu.memory_space<vmem>>, %arg6: memref<16x32xf32, #tpu.memory_space<vmem>>, %arg7: memref<16x32xf32, #tpu.memory_space<vmem>>, %arg8: memref<1x32xf32, #tpu.memory_space<vmem>>, %arg9: memref<1x8x16xf32, #tpu.memory_space<vmem>>, %arg10: memref<1x8x32xf32, #tpu.memory_space<vmem>>, %arg11: memref<1x8x1xf32, #tpu.memory_space<vmem>>, %arg12: memref<1x8x1xf32, #tpu.memory_space<vmem>>, %arg13: memref<1x8x16xf32, #tpu.memory_space<vmem>>) attributes {dimension_semantics = [#tpu.dimension_semantics<parallel>, #tpu.dimension_semantics<parallel>, #tpu.dimension_semantics<arbitrary>], iteration_bounds = array<i64: 2, 1, 1>, scalar_prefetch = 0 : i64, scratch_operands = 4 : i64, tpu.core_type = #tpu.core_type<tc>, window_params = [{transform_indices = @transform_0, window_bounds = array<i64: 1, 8, 16>}, {transform_indices = @transform_1, window_bounds = array<i64: 1, 8, 16>}, {transform_indices = @transform_2, window_bounds = array<i64: 1, 8, 16>}, {pipeline_mode = #tpu.pipeline_mode<synchronous>, transform_indices = @transform_3, window_bounds = array<i64: 16, 32>}, {pipeline_mode = #tpu.pipeline_mode<synchronous>, transform_indices = @transform_4, window_bounds = array<i64: 16, 32>}, {pipeline_mode = #tpu.pipeline_mode<synchronous>, transform_indices = @transform_5, window_bounds = array<i64: 1, 32>}, {transform_indices = @transform_6, window_bounds = array<i64: 1, 8, 16>}]} {
    %c0_i32 = arith.constant 0 : i32
    %0 = arith.cmpi eq, %arg2, %c0_i32 : i32
    %1 = arith.extui %0 : i1 to i32
    %c0_i32_0 = arith.constant 0 : i32
    %2 = arith.cmpi ne, %1, %c0_i32_0 : i32
    scf.if %2 {
      %c0_37 = arith.constant 0 : index
      %c0_38 = arith.constant 0 : index
      %c0_39 = arith.constant 0 : index
      %46 = vector.load %arg3[%c0_37, %c0_38, %c0_39] : memref<1x8x16xf32, #tpu.memory_space<vmem>>, vector<1x8x16xf32>
      %47 = vector.shape_cast %46 : vector<1x8x16xf32> to vector<8x16xf32>
      %c0_40 = arith.constant 0 : index
      %c0_41 = arith.constant 0 : index
      %48 = vector.load %arg6[%c0_40, %c0_41] : memref<16x32xf32, #tpu.memory_space<vmem>>, vector<16x32xf32>
      %cst_42 = arith.constant dense<0.000000e+00> : vector<8x32xf32>
      %49 = tpu.matmul %47, %48, %cst_42 {dimension_numbers = #tpu.dot_dimension_numbers<[1], [0], [0], [1], [0, 0, 1, 1], [], []>} : vector<8x16xf32>, vector<16x32xf32>, vector<8x32xf32> -> vector<8x32xf32>
      %50 = vector.shape_cast %49 : vector<8x32xf32> to vector<1x8x32xf32>
      %c0_43 = arith.constant 0 : index
      %c0_44 = arith.constant 0 : index
      %c0_45 = arith.constant 0 : index
      %51 = vector.load %arg10[%c0_43, %c0_44, %c0_45] : memref<1x8x32xf32, #tpu.memory_space<vmem>>, vector<1x8x32xf32>
      tpu.vector_store %arg10[%c0_43, %c0_44, %c0_45], %50 {strides = array<i32>} : memref<1x8x32xf32, #tpu.memory_space<vmem>>, vector<1x8x32xf32>,
      %cst_46 = arith.constant 0xFF800000 : f32
      %52 = vector.broadcast %cst_46 : f32 to vector<1x8x1xf32>
      %c0_47 = arith.constant 0 : index
      %c0_48 = arith.constant 0 : index
      %c0_49 = arith.constant 0 : index
      %53 = vector.load %arg11[%c0_47, %c0_48, %c0_49] : memref<1x8x1xf32, #tpu.memory_space<vmem>>, vector<1x8x1xf32>
      tpu.vector_store %arg11[%c0_47, %c0_48, %c0_49], %52 {strides = array<i32>} : memref<1x8x1xf32, #tpu.memory_space<vmem>>, vector<1x8x1xf32>,
      %cst_50 = arith.constant 0.000000e+00 : f32
      %54 = vector.broadcast %cst_50 : f32 to vector<1x8x1xf32>
      %c0_51 = arith.constant 0 : index
      %c0_52 = arith.constant 0 : index
      %c0_53 = arith.constant 0 : index
      %55 = vector.load %arg12[%c0_51, %c0_52, %c0_53] : memref<1x8x1xf32, #tpu.memory_space<vmem>>, vector<1x8x1xf32>
      tpu.vector_store %arg12[%c0_51, %c0_52, %c0_53], %54 {strides = array<i32>} : memref<1x8x1xf32, #tpu.memory_space<vmem>>, vector<1x8x1xf32>,
      %cst_54 = arith.constant 0.000000e+00 : f32
      %56 = vector.broadcast %cst_54 : f32 to vector<1x8x16xf32>
      %c0_55 = arith.constant 0 : index
      %c0_56 = arith.constant 0 : index
      %c0_57 = arith.constant 0 : index
      %57 = vector.load %arg13[%c0_55, %c0_56, %c0_57] : memref<1x8x16xf32, #tpu.memory_space<vmem>>, vector<1x8x16xf32>
      tpu.vector_store %arg13[%c0_55, %c0_56, %c0_57], %56 {strides = array<i32>} : memref<1x8x16xf32, #tpu.memory_space<vmem>>, vector<1x8x16xf32>,
    } else {
    }
    %c0 = arith.constant 0 : index
    %c0_1 = arith.constant 0 : index
    %c0_2 = arith.constant 0 : index
    %3 = vector.load %arg4[%c0, %c0_1, %c0_2] : memref<1x8x16xf32, #tpu.memory_space<vmem>>, vector<1x8x16xf32>
    %4 = vector.shape_cast %3 : vector<1x8x16xf32> to vector<8x16xf32>
    %c0_3 = arith.constant 0 : index
    %c0_4 = arith.constant 0 : index
    %5 = vector.load %arg7[%c0_3, %c0_4] : memref<16x32xf32, #tpu.memory_space<vmem>>, vector<16x32xf32>
    %cst = arith.constant dense<0.000000e+00> : vector<8x32xf32>
    %6 = tpu.matmul %4, %5, %cst {dimension_numbers = #tpu.dot_dimension_numbers<[1], [0], [0], [1], [0, 0, 1, 1], [], []>} : vector<8x16xf32>, vector<16x32xf32>, vector<8x32xf32> -> vector<8x32xf32>
    %7 = vector.shape_cast %6 : vector<8x32xf32> to vector<1x8x32xf32>
    %c0_5 = arith.constant 0 : index
    %c0_6 = arith.constant 0 : index
    %8 = vector.load %arg8[%c0_5, %c0_6] : memref<1x32xf32, #tpu.memory_space<vmem>>, vector<1x32xf32>
    %9 = vector.shape_cast %8 : vector<1x32xf32> to vector<1x1x1x32xf32>
    %c0_7 = arith.constant 0 : index
    %c0_8 = arith.constant 0 : index
    %c0_9 = arith.constant 0 : index
    %10 = vector.load %arg5[%c0_7, %c0_8, %c0_9] : memref<1x8x16xf32, #tpu.memory_space<vmem>>, vector<1x8x16xf32>
    %c0_10 = arith.constant 0 : index
    %c0_11 = arith.constant 0 : index
    %c0_12 = arith.constant 0 : index
    %11 = vector.load %arg10[%c0_10, %c0_11, %c0_12] : memref<1x8x32xf32, #tpu.memory_space<vmem>>, vector<1x8x32xf32>
    %12 = vector.shape_cast %11 : vector<1x8x32xf32> to vector<1x8x1x32xf32>
    %13 = vector.shape_cast %7 : vector<1x8x32xf32> to vector<1x1x8x32xf32>
    %14 = vector.broadcast %12 : vector<1x8x1x32xf32> to vector<1x8x8x32xf32>
    %15 = vector.broadcast %13 : vector<1x1x8x32xf32> to vector<1x8x8x32xf32>
    %16 = arith.addf %14, %15 : vector<1x8x8x32xf32>
    %17 = math.tanh %16 : vector<1x8x8x32xf32>
    %18 = vector.broadcast %9 : vector<1x1x1x32xf32> to vector<1x8x8x32xf32>
    %19 = arith.mulf %17, %18 : vector<1x8x8x32xf32>
    %cst_13 = arith.constant dense<0.000000e+00> : vector<1x8x8xf32>
    %20 = vector.multi_reduction <add>, %19, %cst_13 [3] : vector<1x8x8x32xf32> to vector<1x8x8xf32>
    %c0_14 = arith.constant 0 : index
    %c0_15 = arith.constant 0 : index
    %c0_16 = arith.constant 0 : index
    %21 = vector.load %arg11[%c0_14, %c0_15, %c0_16] : memref<1x8x1xf32, #tpu.memory_space<vmem>>, vector<1x8x1xf32>
    %c0_17 = arith.constant 0 : index
    %c0_18 = arith.constant 0 : index
    %c0_19 = arith.constant 0 : index
    %22 = vector.load %arg12[%c0_17, %c0_18, %c0_19] : memref<1x8x1xf32, #tpu.memory_space<vmem>>, vector<1x8x1xf32>
    %c0_20 = arith.constant 0 : index
    %c0_21 = arith.constant 0 : index
    %c0_22 = arith.constant 0 : index
    %23 = vector.load %arg13[%c0_20, %c0_21, %c0_22] : memref<1x8x16xf32, #tpu.memory_space<vmem>>, vector<1x8x16xf32>
    %cst_23 = arith.constant dense<0xFF800000> : vector<1x8xf32>
    %24 = vector.multi_reduction <maximumf>, %20, %cst_23 [2] : vector<1x8x8xf32> to vector<1x8xf32>
    %25 = vector.shape_cast %24 : vector<1x8xf32> to vector<1x8x1xf32>
    %26 = arith.maximumf %21, %25 : vector<1x8x1xf32>
    %27 = arith.subf %21, %26 : vector<1x8x1xf32>
    %28 = math.exp %27 : vector<1x8x1xf32>
    %29 = vector.broadcast %26 : vector<1x8x1xf32> to vector<1x8x8xf32>
    %30 = arith.subf %20, %29 : vector<1x8x8xf32>
    %31 = math.exp %30 : vector<1x8x8xf32>
    %32 = arith.mulf %28, %22 : vector<1x8x1xf32>
    %cst_24 = arith.constant dense<0.000000e+00> : vector<1x8xf32>
    %33 = vector.multi_reduction <add>, %31, %cst_24 [2] : vector<1x8x8xf32> to vector<1x8xf32>
    %34 = vector.shape_cast %33 : vector<1x8xf32> to vector<1x8x1xf32>
    %35 = arith.addf %32, %34 : vector<1x8x1xf32>
    %c0_25 = arith.constant 0 : index
    %c0_26 = arith.constant 0 : index
    %c0_27 = arith.constant 0 : index
    %36 = vector.load %arg12[%c0_25, %c0_26, %c0_27] : memref<1x8x1xf32, #tpu.memory_space<vmem>>, vector<1x8x1xf32>
    tpu.vector_store %arg12[%c0_25, %c0_26, %c0_27], %35 {strides = array<i32>} : memref<1x8x1xf32, #tpu.memory_space<vmem>>, vector<1x8x1xf32>,
    %37 = vector.broadcast %28 : vector<1x8x1xf32> to vector<1x8x16xf32>
    %38 = arith.mulf %37, %23 : vector<1x8x16xf32>
    "tpu.trace_start"() <{level = 10 : i32, message = "bqk,bkd->bqd"}> : () -> ()
    %cst_28 = arith.constant dense<0.000000e+00> : vector<1x8x16xf32>
    %39 = tpu.matmul %31, %10, %cst_28 {dimension_numbers = #tpu.dot_dimension_numbers<[2], [1], [1], [2], [0, 0, 0, 1, 1, 2], [0], [0]>} : vector<1x8x8xf32>, vector<1x8x16xf32>, vector<1x8x16xf32> -> vector<1x8x16xf32>
    "tpu.trace_stop"() : () -> ()
    %40 = arith.addf %38, %39 : vector<1x8x16xf32>
    %c0_29 = arith.constant 0 : index
    %c0_30 = arith.constant 0 : index
    %c0_31 = arith.constant 0 : index
    %41 = vector.load %arg13[%c0_29, %c0_30, %c0_31] : memref<1x8x16xf32, #tpu.memory_space<vmem>>, vector<1x8x16xf32>
    tpu.vector_store %arg13[%c0_29, %c0_30, %c0_31], %40 {strides = array<i32>} : memref<1x8x16xf32, #tpu.memory_space<vmem>>, vector<1x8x16xf32>,
    %c0_32 = arith.constant 0 : index
    %c0_33 = arith.constant 0 : index
    %c0_34 = arith.constant 0 : index
    %42 = vector.load %arg11[%c0_32, %c0_33, %c0_34] : memref<1x8x1xf32, #tpu.memory_space<vmem>>, vector<1x8x1xf32>
    tpu.vector_store %arg11[%c0_32, %c0_33, %c0_34], %26 {strides = array<i32>} : memref<1x8x1xf32, #tpu.memory_space<vmem>>, vector<1x8x1xf32>,
    %c0_i32_35 = arith.constant 0 : i32
    %43 = arith.cmpi eq, %arg2, %c0_i32_35 : i32
    %44 = arith.extui %43 : i1 to i32
    %c0_i32_36 = arith.constant 0 : i32
    %45 = arith.cmpi ne, %44, %c0_i32_36 : i32
    scf.if %45 {
      %c0_37 = arith.constant 0 : index
      %c0_38 = arith.constant 0 : index
      %c0_39 = arith.constant 0 : index
      %46 = vector.load %arg13[%c0_37, %c0_38, %c0_39] : memref<1x8x16xf32, #tpu.memory_space<vmem>>, vector<1x8x16xf32>
      %c0_40 = arith.constant 0 : index
      %c0_41 = arith.constant 0 : index
      %c0_42 = arith.constant 0 : index
      %47 = vector.load %arg12[%c0_40, %c0_41, %c0_42] : memref<1x8x1xf32, #tpu.memory_space<vmem>>, vector<1x8x1xf32>
      %48 = vector.broadcast %47 : vector<1x8x1xf32> to vector<1x8x16xf32>
      %49 = arith.divf %46, %48 : vector<1x8x16xf32>
      %c0_43 = arith.constant 0 : index
      %c0_44 = arith.constant 0 : index
      %c0_45 = arith.constant 0 : index
      %50 = vector.load %arg9[%c0_43, %c0_44, %c0_45] : memref<1x8x16xf32, #tpu.memory_space<vmem>>, vector<1x8x16xf32>
      tpu.vector_store %arg9[%c0_43, %c0_44, %c0_45], %49 {strides = array<i32>} : memref<1x8x16xf32, #tpu.memory_space<vmem>>, vector<1x8x16xf32>,
    } else {
    }
    return
  }
  func.func @transform_0(%arg0: i32, %arg1: i32, %arg2: i32) -> (i32, i32, i32) {
    %c0_i32 = arith.constant 0 : i32
    %c0_i32_0 = arith.constant 0 : i32
    return %arg0, %arg1, %c0_i32 : i32, i32, i32
  }
  func.func @transform_1(%arg0: i32, %arg1: i32, %arg2: i32) -> (i32, i32, i32) {
    %c0_i32 = arith.constant 0 : i32
    %c0_i32_0 = arith.constant 0 : i32
    return %arg0, %arg2, %c0_i32 : i32, i32, i32
  }
  func.func @transform_2(%arg0: i32, %arg1: i32, %arg2: i32) -> (i32, i32, i32) {
    %c0_i32 = arith.constant 0 : i32
    %c0_i32_0 = arith.constant 0 : i32
    return %arg0, %arg2, %c0_i32 : i32, i32, i32
  }
  func.func @transform_3(%arg0: i32, %arg1: i32, %arg2: i32) -> (i32, i32) {
    %c0_i32 = arith.constant 0 : i32
    %c0_i32_0 = arith.constant 0 : i32
    %c0_i32_1 = arith.constant 0 : i32
    return %c0_i32, %c0_i32_0 : i32, i32
  }
  func.func @transform_4(%arg0: i32, %arg1: i32, %arg2: i32) -> (i32, i32) {
    %c0_i32 = arith.constant 0 : i32
    %c0_i32_0 = arith.constant 0 : i32
    %c0_i32_1 = arith.constant 0 : i32
    return %c0_i32, %c0_i32_0 : i32, i32
  }
  func.func @transform_5(%arg0: i32, %arg1: i32, %arg2: i32) -> (i32, i32) {
    %c0_i32 = arith.constant 0 : i32
    %c0_i32_0 = arith.constant 0 : i32
    %c0_i32_1 = arith.constant 0 : i32
    return %c0_i32, %c0_i32_0 : i32, i32
  }
  func.func @transform_6(%arg0: i32, %arg1: i32, %arg2: i32) -> (i32, i32, i32) {
    %c0_i32 = arith.constant 0 : i32
    %c0_i32_0 = arith.constant 0 : i32
    return %arg0, %arg1, %c0_i32 : i32, i32, i32
  }
}

</mosaic_0001>

<llo_original>
// kernel: tpu_custom_call.1
$region0: #{tpu_custom_call.1}
  #allocation0 [shape = 'u32[]', space=smem, size = 0x4, offset = 0x4, fixed_abs, tag = 'smem constant byte address 0x4 - core index']
  #allocation1 [shape = 'u32[144,128]{1,0:T(1,128)}', space=vmem, size = 0x12000, scoped, tag = 'internal scratch']
  #allocation2 [shape = 'f32[1,8,32]{2,1,0:T(8,128)}', space=vmem, size = 0x1000, scoped, tag = 'scratch operand']
  #allocation3 [shape = 'f32[1,8,1]{2,1,0:T(8,128)}', space=vmem, size = 0x1000, scoped, tag = 'scratch operand']
  #allocation4 [shape = 'f32[1,8,1]{2,1,0:T(8,128)}', space=vmem, size = 0x1000, scoped, tag = 'scratch operand']
  #allocation5 [shape = 'f32[1,8,16]{2,1,0:T(8,128)}', space=vmem, size = 0x1000, scoped, tag = 'scratch operand']
  %s0 = inlined_call_operand.hbm [shape: f32[2,8,16], index: 0, kind: input, shape index: {}]
  %s1 = inlined_call_operand.hbm [shape: f32[2,8,16], index: 1, kind: input, shape index: {}]
  %s2 = inlined_call_operand.hbm [shape: f32[2,8,16], index: 2, kind: input, shape index: {}]
  %s3 = inlined_call_operand.hbm [shape: f32[16,32], index: 3, kind: input, shape index: {}]
  %s4 = inlined_call_operand.hbm [shape: f32[16,32], index: 4, kind: input, shape index: {}]
  %s5 = inlined_call_operand.vmem [shape: f32[1,32], index: 5, kind: input, shape index: {}]
  %s6 = inlined_call_operand.hbm [shape: f32[2,8,16], index: 6, kind: output, shape index: {}]
  %s7 = sld [smem:[#allocation0]]
  $region85: #{tpu_custom_call.1} parent=0
    _
  %s9 = ssub.s32 1, %s7
  %s10 = scalar_select 0, %s9, %s7
  $region1: #{tpu_custom_call.1} parent=0
    #allocation6 [shape = 'u8[8192]{0}', space=vmem, size = 0x2000, scoped, tag = 'input window, operand 0']
    #allocation7 [shape = 's32[2]{0}', space=sflag, size = 0x8, scoped, tag = 'scoped memory for tpu_custom_call.1']
    #allocation8 [shape = 's32[2]{0}', space=sflag, size = 0x8, scoped, tag = 'scoped memory for tpu_custom_call.1']
    #allocation9 [shape = 'u8[8192]{0}', space=vmem, size = 0x2000, scoped, tag = 'input window, operand 1']
    #allocation10 [shape = 's32[2]{0}', space=sflag, size = 0x8, scoped, tag = 'scoped memory for tpu_custom_call.1']
    #allocation11 [shape = 'u8[8192]{0}', space=vmem, size = 0x2000, scoped, tag = 'input window, operand 2']
    #allocation12 [shape = 'u8[8192]{0}', space=vmem, size = 0x2000, scoped, tag = 'input window, operand 3, single buffered']
    #allocation13 [shape = 's32[1]{0}', space=sflag, size = 0x4, scoped, tag = 'scoped memory for tpu_custom_call.1']
    #allocation14 [shape = 'u8[8192]{0}', space=vmem, size = 0x2000, scoped, tag = 'input window, operand 4, single buffered']
    #allocation15 [shape = 'u8[8192]{0}', space=vmem, size = 0x2000, scoped, tag = 'output window, operand 0']
    %11 = vsyncpa [#allocation7], 0
    %s12 = scalar_lea.sflag [#allocation7], 1
    %13 = vsyncpa %s12, 0
    %14 = vsyncpa [#allocation10], 0
    %s15 = scalar_lea.sflag [#allocation10], 1
    %16 = vsyncpa %s15, 0
    %17 = vsyncpa [#allocation13], 0
    %18 = vsyncpa [#allocation8], 0
    %s19 = scalar_lea.sflag [#allocation8], 1
    %20 = vsyncpa %s19, 0
    loop: start=0, step=1, limit=4
    $region2: #{tpu_custom_call.1} parent=1 // loop_pre_header
      _
    $region3: #{tpu_custom_call.1} parent=1 // loop_header
      %s22 = sphi 0, %s26
      %p23 = scmp.ge.s32.totalorder %s22, 4
      %s29 = sphi 0, %s48
      %s30 = sphi 0, %s44
      %s31 = sphi 0, %s40
      %s32 = sphi 0, %s29
      %s33 = sphi 0, %s30
      %s34 = sphi 0, %s31
      %s35 = sphi 0, %s32
      %s36 = sphi 0, %s33
      %s37 = sphi 0, %s34
      %s53 = sphi 0, %s55
      %s56 = sphi 0, %s53
      %s57 = sphi 0, %s56
      %s73 = sphi 0, %s57
      %s81 = sphi 0, %s83
      %s84 = sphi 0, %s81
      %s85 = sphi 0, %s84
      %s101 = sphi 0, %s85
      %s109 = sphi 0, %s111
      %s112 = sphi 0, %s109
      %s113 = sphi 0, %s112
      %s129 = sphi 0, %s113
      %s133 = sphi 0, %s133
      %s135 = sphi 0, %s133
      %s136 = sphi 0, %s135
      %s150 = sphi 0, %s136
      %s154 = sphi 0, %s154
      %s156 = sphi 0, %s154
      %s157 = sphi 0, %s156
      %s171 = sphi 0, %s157
      %s175 = sphi 0, %s175
      %s177 = sphi 0, %s175
      %s178 = sphi 0, %s177
      %s192 = sphi 0, %s178
      %s200 = sphi 0, %s202
      %s203 = sphi 0, %s200
      %s204 = sphi 0, %s203
      %s220 = sphi 0, %s204
    $region4: #{tpu_custom_call.1} parent=1 // loop_header_branch
      %25 = sbr.rel (%p23) target = $region8
    $region5: #{tpu_custom_call.1} parent=1 // loop_body
      %s27 = ssub.s32 %s22, 1
      %s28 = ssub.s32 %s22, 2
      %s38 = sadd.s32 1, %s31
      %p39 = scmp.ge.s32.totalorder %s38, 1
      %s40 = scalar_select %p39, 0, %s38
      %s41 = sadd.s32 1, %s30
      %s42 = scalar_select %p39, %s41, %s30
      %p43 = scmp.ge.s32.totalorder %s42, 1
      %s44 = scalar_select %p43, 0, %s42
      %s45 = sadd.s32 1, %s29
      %s46 = scalar_select %p43, %s45, %s29
      %p47 = scmp.ge.s32.totalorder %s46, 2
      %s48 = scalar_select %p47, 0, %s46
      %s49 = ssub.s32 %s29, %s48
      %s50 = ssub.s32 %s30, %s44
      %s51 = sor.u32 %s49, %s50
      %p52 = scmp.eq.s32.totalorder %s51, 0
      %s54 = sadd.s32 %s53, 1
      %s55 = scalar_select %p52, %s53, %s54
      %p58 = pneg %p52
      %p59 = scmp.eq.s32.totalorder %s22, 1
      %p60 = por %p58, %p59
      %p61 = scmp.ne.s32.totalorder %s53, %s56
      %p62 = scmp.eq.s32.totalorder %s22, 0
      %p63 = por %p61, %p62
      %p64 = scmp.ne.s32.totalorder %s53, %s56
      %p65 = scmp.eq.s32.totalorder %s27, 1
      %p66 = por %p64, %p65
      %p67 = scmp.ne.s32.totalorder %s56, %s57
      %p68 = scmp.eq.s32.totalorder %s27, 0
      %p69 = por %p67, %p68
      %p70 = scmp.ne.s32.totalorder %s56, %s57
      %p71 = scmp.eq.s32.totalorder %s28, 1
      %p72 = por %p70, %p71
      %p74 = scmp.ne.s32.totalorder %s57, %s73
      %p75 = scmp.eq.s32.totalorder %s28, 0
      %p76 = por %p74, %p75
      %s77 = ssub.s32 %s29, %s48
      %s78 = ssub.s32 %s31, %s40
      %s79 = sor.u32 %s77, %s78
      %p80 = scmp.eq.s32.totalorder %s79, 0
      %s82 = sadd.s32 %s81, 1
      %s83 = scalar_select %p80, %s81, %s82
      %p86 = pneg %p80
      %p87 = scmp.eq.s32.totalorder %s22, 1
      %p88 = por %p86, %p87
      %p89 = scmp.ne.s32.totalorder %s81, %s84
      %p90 = scmp.eq.s32.totalorder %s22, 0
      %p91 = por %p89, %p90
      %p92 = scmp.ne.s32.totalorder %s81, %s84
      %p93 = scmp.eq.s32.totalorder %s27, 1
      %p94 = por %p92, %p93
      %p95 = scmp.ne.s32.totalorder %s84, %s85
      %p96 = scmp.eq.s32.totalorder %s27, 0
      %p97 = por %p95, %p96
      %p98 = scmp.ne.s32.totalorder %s84, %s85
      %p99 = scmp.eq.s32.totalorder %s28, 1
      %p100 = por %p98, %p99
      %p102 = scmp.ne.s32.totalorder %s85, %s101
      %p103 = scmp.eq.s32.totalorder %s28, 0
      %p104 = por %p102, %p103
      %s105 = ssub.s32 %s29, %s48
      %s106 = ssub.s32 %s31, %s40
      %s107 = sor.u32 %s105, %s106
      %p108 = scmp.eq.s32.totalorder %s107, 0
      %s110 = sadd.s32 %s109, 1
      %s111 = scalar_select %p108, %s109, %s110
      %p114 = pneg %p108
      %p115 = scmp.eq.s32.totalorder %s22, 1
      %p116 = por %p114, %p115
      %p117 = scmp.ne.s32.totalorder %s109, %s112
      %p118 = scmp.eq.s32.totalorder %s22, 0
      %p119 = por %p117, %p118
      %p120 = scmp.ne.s32.totalorder %s109, %s112
      %p121 = scmp.eq.s32.totalorder %s27, 1
      %p122 = por %p120, %p121
      %p123 = scmp.ne.s32.totalorder %s112, %s113
      %p124 = scmp.eq.s32.totalorder %s27, 0
      %p125 = por %p123, %p124
      %p126 = scmp.ne.s32.totalorder %s112, %s113
      %p127 = scmp.eq.s32.totalorder %s28, 1
      %p128 = por %p126, %p127
      %p130 = scmp.ne.s32.totalorder %s113, %s129
      %p131 = scmp.eq.s32.totalorder %s28, 0
      %p132 = por %p130, %p131
      %s134 = sadd.s32 %s133, 1
      %p137 = scmp.eq.s32.totalorder %s22, 1
      %p138 = scmp.ne.s32.totalorder %s133, %s135
      %p139 = scmp.eq.s32.totalorder %s22, 0
      %p140 = por %p138, %p139
      %p141 = scmp.ne.s32.totalorder %s133, %s135
      %p142 = scmp.eq.s32.totalorder %s27, 1
      %p143 = por %p141, %p142
      %p144 = scmp.ne.s32.totalorder %s135, %s136
      %p145 = scmp.eq.s32.totalorder %s27, 0
      %p146 = por %p144, %p145
      %p147 = scmp.ne.s32.totalorder %s135, %s136
      %p148 = scmp.eq.s32.totalorder %s28, 1
      %p149 = por %p147, %p148
      %p151 = scmp.ne.s32.totalorder %s136, %s150
      %p152 = scmp.eq.s32.totalorder %s28, 0
      %p153 = por %p151, %p152
      %s155 = sadd.s32 %s154, 1
      %p158 = scmp.eq.s32.totalorder %s22, 1
      %p159 = scmp.ne.s32.totalorder %s154, %s156
      %p160 = scmp.eq.s32.totalorder %s22, 0
      %p161 = por %p159, %p160
      %p162 = scmp.ne.s32.totalorder %s154, %s156
      %p163 = scmp.eq.s32.totalorder %s27, 1
      %p164 = por %p162, %p163
      %p165 = scmp.ne.s32.totalorder %s156, %s157
      %p166 = scmp.eq.s32.totalorder %s27, 0
      %p167 = por %p165, %p166
      %p168 = scmp.ne.s32.totalorder %s156, %s157
      %p169 = scmp.eq.s32.totalorder %s28, 1
      %p170 = por %p168, %p169
      %p172 = scmp.ne.s32.totalorder %s157, %s171
      %p173 = scmp.eq.s32.totalorder %s28, 0
      %p174 = por %p172, %p173
      %s176 = sadd.s32 %s175, 1
      %p179 = scmp.eq.s32.totalorder %s22, 1
      %p180 = scmp.ne.s32.totalorder %s175, %s177
      %p181 = scmp.eq.s32.totalorder %s22, 0
      %p182 = por %p180, %p181
      %p183 = scmp.ne.s32.totalorder %s175, %s177
      %p184 = scmp.eq.s32.totalorder %s27, 1
      %p185 = por %p183, %p184
      %p186 = scmp.ne.s32.totalorder %s177, %s178
      %p187 = scmp.eq.s32.totalorder %s27, 0
      %p188 = por %p186, %p187
      %p189 = scmp.ne.s32.totalorder %s177, %s178
      %p190 = scmp.eq.s32.totalorder %s28, 1
      %p191 = por %p189, %p190
      %p193 = scmp.ne.s32.totalorder %s178, %s192
      %p194 = scmp.eq.s32.totalorder %s28, 0
      %p195 = por %p193, %p194
      %s196 = ssub.s32 %s29, %s48
      %s197 = ssub.s32 %s30, %s44
      %s198 = sor.u32 %s196, %s197
      %p199 = scmp.eq.s32.totalorder %s198, 0
      %s201 = sadd.s32 %s200, 1
      %s202 = scalar_select %p199, %s200, %s201
      %p205 = pneg %p199
      %p206 = scmp.eq.s32.totalorder %s22, 1
      %p207 = por %p205, %p206
      %p208 = scmp.ne.s32.totalorder %s200, %s203
      %p209 = scmp.eq.s32.totalorder %s22, 0
      %p210 = por %p208, %p209
      %p211 = scmp.ne.s32.totalorder %s200, %s203
      %p212 = scmp.eq.s32.totalorder %s27, 1
      %p213 = por %p211, %p212
      %p214 = scmp.ne.s32.totalorder %s203, %s204
      %p215 = scmp.eq.s32.totalorder %s27, 0
      %p216 = por %p214, %p215
      %p217 = scmp.ne.s32.totalorder %s203, %s204
      %p218 = scmp.eq.s32.totalorder %s28, 1
      %p219 = por %p217, %p218
      %p221 = scmp.ne.s32.totalorder %s204, %s220
      %p222 = scmp.eq.s32.totalorder %s28, 0
      %p223 = por %p221, %p222
      %p224 = scmp.le.s32.totalorder 1, %s22
      %p225 = scmp.lt.s32.totalorder %s22, 3
      %p226 = pnand %p224, %p225
      %p227 = pneg %p226
      // Predicated region
      $region9: #{tpu_custom_call.1} parent=5 // pred_check
        _
      $region10: #{tpu_custom_call.1} parent=5 // pred_check_branch
        %229 = sbr.rel (%p226) target = $region12
      $region11: #{tpu_custom_call.1} parent=5 // pred_region
        %s230 = ssub.s32 %s22, 1
        // Predicated region
        $region13: #{tpu_custom_call.1} parent=11 // pred_check
          %p231 = pneg %p146
        $region14: #{tpu_custom_call.1} parent=11 // pred_check_branch
          %233 = sbr.rel (%p231) target = $region16
        $region15: #{tpu_custom_call.1} parent=11 // pred_region
          %s235 = ssub.s32 256, 256
          %236 = vsyncadd [#allocation13], %s235
          %s237 = sshll.u32 [#allocation12], 4
          %s238 = int_to_ptr.vmem [resolvable:$true] %s237
          %243 = dma.hbm_to_vmem [thread:$0]  %s3, 256, %s238, [#allocation13], 128, 128, 8
        $region16: #{tpu_custom_call.1} parent=11 // pred_fallthru
          _
        // Predicated region
        $region17: #{tpu_custom_call.1} parent=11 // pred_check
          %p244 = pneg %p167
        $region18: #{tpu_custom_call.1} parent=11 // pred_check_branch
          %246 = sbr.rel (%p244) target = $region20
        $region19: #{tpu_custom_call.1} parent=11 // pred_region
          %s248 = ssub.s32 256, 256
          %249 = vsyncadd [#allocation13], %s248
          %s250 = sshll.u32 [#allocation14], 4
          %s251 = int_to_ptr.vmem [resolvable:$true] %s250
          %256 = dma.hbm_to_vmem [thread:$0]  %s4, 256, %s251, [#allocation13], 128, 128, 8
        $region20: #{tpu_custom_call.1} parent=11 // pred_fallthru
          _
        // Predicated region
        $region21: #{tpu_custom_call.1} parent=11 // pred_check
          %p257 = pneg %p188
        $region22: #{tpu_custom_call.1} parent=11 // pred_check_branch
          %259 = sbr.rel (%p257) target = $region24
        $region23: #{tpu_custom_call.1} parent=11 // pred_region
          _
        $region24: #{tpu_custom_call.1} parent=11 // pred_fallthru
          _
      $region12: #{tpu_custom_call.1} parent=5 // pred_fallthru
        _
      %p260 = scmp.lt.s32.totalorder %s22, 2
      // Predicated region
      $region25: #{tpu_custom_call.1} parent=5 // pred_check
        %p261 = pneg %p260
      $region26: #{tpu_custom_call.1} parent=5 // pred_check_branch
        %263 = sbr.rel (%p261) target = $region28
      $region27: #{tpu_custom_call.1} parent=5 // pred_region
        // Predicated region
        $region29: #{tpu_custom_call.1} parent=27 // pred_check
          %p264 = pneg %p63
        $region30: #{tpu_custom_call.1} parent=27 // pred_check_branch
          %266 = sbr.rel (%p264) target = $region32
        $region31: #{tpu_custom_call.1} parent=27 // pred_region
          %s267 = sand.u32 %s53, 1
          %s268 = scalar_lea.sflag [#allocation7], %s267
          %s269 = sand.u32 %s53, 1
          %s270 = smul.addr %s269, 8
          %s271 = scalar_lea.vmem [#allocation6], %s270
          %s273 = ssub.s32 128, 128
          %274 = vsyncadd %s268, %s273
          %s275 = sadd.s32 %s30, %s29
          %s276 = smul.addr %s275, 128
          %s277 = scalar_lea.hbm %s0, %s276
          %s279 = sshll.u32 %s271, 4
          %s280 = int_to_ptr.vmem [resolvable:$true] %s279
          %282 = dma.hbm_to_vmem [thread:$0]  %s277, 128, %s280, %s268
        $region32: #{tpu_custom_call.1} parent=27 // pred_fallthru
          _
        // Predicated region
        $region33: #{tpu_custom_call.1} parent=27 // pred_check
          %p283 = pneg %p91
        $region34: #{tpu_custom_call.1} parent=27 // pred_check_branch
          %285 = sbr.rel (%p283) target = $region36
        $region35: #{tpu_custom_call.1} parent=27 // pred_region
          %s286 = sand.u32 %s22, 1
          %s287 = scalar_lea.sflag [#allocation10], %s286
          %s288 = sand.u32 %s81, 1
          %s289 = smul.addr %s288, 8
          %s290 = scalar_lea.vmem [#allocation9], %s289
          %s292 = ssub.s32 128, 128
          %293 = vsyncadd %s287, %s292
          %s294 = sadd.s32 %s31, %s29
          %s295 = smul.addr %s294, 128
          %s296 = scalar_lea.hbm %s1, %s295
          %s298 = sshll.u32 %s290, 4
          %s299 = int_to_ptr.vmem [resolvable:$true] %s298
          %301 = dma.hbm_to_vmem [thread:$0]  %s296, 128, %s299, %s287
        $region36: #{tpu_custom_call.1} parent=27 // pred_fallthru
          _
        // Predicated region
        $region37: #{tpu_custom_call.1} parent=27 // pred_check
          %p302 = pneg %p119
        $region38: #{tpu_custom_call.1} parent=27 // pred_check_branch
          %304 = sbr.rel (%p302) target = $region40
        $region39: #{tpu_custom_call.1} parent=27 // pred_region
          %s305 = sand.u32 %s22, 1
          %s306 = scalar_lea.sflag [#allocation10], %s305
          %s307 = sand.u32 %s109, 1
          %s308 = smul.addr %s307, 8
          %s309 = scalar_lea.vmem [#allocation11], %s308
          %s311 = ssub.s32 128, 128
          %312 = vsyncadd %s306, %s311
          %s313 = sadd.s32 %s31, %s29
          %s314 = smul.addr %s313, 128
          %s315 = scalar_lea.hbm %s2, %s314
          %s317 = sshll.u32 %s309, 4
          %s318 = int_to_ptr.vmem [resolvable:$true] %s317
          %320 = dma.hbm_to_vmem [thread:$0]  %s315, 128, %s318, %s306
        $region40: #{tpu_custom_call.1} parent=27 // pred_fallthru
          _
      $region28: #{tpu_custom_call.1} parent=5 // pred_fallthru
        _
      %p321 = scmp.le.s32.totalorder 1, %s22
      %p322 = scmp.lt.s32.totalorder %s22, 3
      %p323 = pnand %p321, %p322
      %p324 = pneg %p323
      // Predicated region
      $region41: #{tpu_custom_call.1} parent=5 // pred_check
        _
      $region42: #{tpu_custom_call.1} parent=5 // pred_check_branch
        %326 = sbr.rel (%p323) target = $region44
      $region43: #{tpu_custom_call.1} parent=5 // pred_region
        %s327 = ssub.s32 %s22, 1
        %s328 = sand.u32 %s56, 1
        %s329 = scalar_lea.sflag [#allocation7], %s328
        %s330 = sand.u32 %s56, 1
        %s331 = smul.addr %s330, 8
        %s332 = scalar_lea.vmem [#allocation6], %s331
        // Predicated region
        $region45: #{tpu_custom_call.1} parent=43 // pred_check
          %p333 = pneg %p69
        $region46: #{tpu_custom_call.1} parent=43 // pred_check_branch
          %335 = sbr.rel (%p333) target = $region48
        $region47: #{tpu_custom_call.1} parent=43 // pred_region
          %336 = dma.done %s329, 128
        $region48: #{tpu_custom_call.1} parent=43 // pred_fallthru
          _
        %s337 = sand.u32 %s27, 1
        %s338 = scalar_lea.sflag [#allocation10], %s337
        %s339 = sand.u32 %s84, 1
        %s340 = smul.addr %s339, 8
        %s341 = scalar_lea.vmem [#allocation9], %s340
        // Predicated region
        $region49: #{tpu_custom_call.1} parent=43 // pred_check
          %p342 = pneg %p97
        $region50: #{tpu_custom_call.1} parent=43 // pred_check_branch
          %344 = sbr.rel (%p342) target = $region52
        $region51: #{tpu_custom_call.1} parent=43 // pred_region
          %345 = dma.done %s338, 128
        $region52: #{tpu_custom_call.1} parent=43 // pred_fallthru
          _
        %s346 = sand.u32 %s27, 1
        %s347 = scalar_lea.sflag [#allocation10], %s346
        %s348 = sand.u32 %s112, 1
        %s349 = smul.addr %s348, 8
        %s350 = scalar_lea.vmem [#allocation11], %s349
        // Predicated region
        $region53: #{tpu_custom_call.1} parent=43 // pred_check
          %p351 = pneg %p125
        $region54: #{tpu_custom_call.1} parent=43 // pred_check_branch
          %353 = sbr.rel (%p351) target = $region56
        $region55: #{tpu_custom_call.1} parent=43 // pred_region
          %354 = dma.done %s347, 128
        $region56: #{tpu_custom_call.1} parent=43 // pred_fallthru
          _
        // Predicated region
        $region57: #{tpu_custom_call.1} parent=43 // pred_check
          %p355 = pneg %p146
        $region58: #{tpu_custom_call.1} parent=43 // pred_check_branch
          %357 = sbr.rel (%p355) target = $region60
        $region59: #{tpu_custom_call.1} parent=43 // pred_region
          %358 = dma.done [#allocation13], 256
        $region60: #{tpu_custom_call.1} parent=43 // pred_fallthru
          _
        // Predicated region
        $region61: #{tpu_custom_call.1} parent=43 // pred_check
          %p359 = pneg %p167
        $region62: #{tpu_custom_call.1} parent=43 // pred_check_branch
          %361 = sbr.rel (%p359) target = $region64
        $region63: #{tpu_custom_call.1} parent=43 // pred_region
          %362 = dma.done [#allocation13], 256
        $region64: #{tpu_custom_call.1} parent=43 // pred_fallthru
          _
        %s363 = sand.u32 %s56, 1
        %s364 = scalar_lea.sflag [#allocation7], %s363
        %s365 = sand.u32 %s56, 1
        %s366 = smul.addr %s365, 8
        %s367 = scalar_lea.vmem [#allocation6], %s366
        %p368 = pneg %p69
        %p369 = pneg %p66
        %s370 = sand.u32 %s27, 1
        %s371 = scalar_lea.sflag [#allocation10], %s370
        %s372 = sand.u32 %s84, 1
        %s373 = smul.addr %s372, 8
        %s374 = scalar_lea.vmem [#allocation9], %s373
        %p375 = pneg %p97
        %p376 = pneg %p94
        %s377 = sand.u32 %s27, 1
        %s378 = scalar_lea.sflag [#allocation10], %s377
        %s379 = sand.u32 %s112, 1
        %s380 = smul.addr %s379, 8
        %s381 = scalar_lea.vmem [#allocation11], %s380
        %p382 = pneg %p125
        %p383 = pneg %p122
        %p384 = pneg %p146
        %p385 = pneg %p143
        %p386 = pneg %p167
        %p387 = pneg %p164
        %p388 = pneg %p188
        %p389 = pneg %p185
        %p390 = pneg %p216
        %p391 = pneg %p213
        %s392 = sand.u32 %s203, 1
        %s393 = scalar_lea.sflag [#allocation8], %s392
        %s394 = sand.u32 %s203, 1
        %s395 = smul.addr %s394, 8
        %s396 = scalar_lea.vmem [#allocation15], %s395
        %p397 = scmp.eq.s32.totalorder %s34, 0
        // Predicated region
        $region65: #{tpu_custom_call.1} parent=43 // pred_check
          %p398 = pneg %p397
        $region66: #{tpu_custom_call.1} parent=43 // pred_check_branch
          %400 = sbr.rel (%p398) target = $region68
        $region67: #{tpu_custom_call.1} parent=43 // pred_region
          %v401 = vld [vmem:[%s332] sm:$0xff]
          %v402 = vld [vmem:[#allocation12] sm:$0xff]
          %v403 = vld [vmem:[#allocation12 + $0x8] sm:$0xff]
          %vm404 = vcmask 130048
          %v406 = vsel %vm404, %v401, 0
          %408 = vmatprep.subr.mxu0 0.0
          %409 = vmatpush1.msra.mxu0 0.0
          %410 = vmatprep.subr.mxu0 0.0
          %411 = vmatpush1.msra.mxu0 0.0
          %412 = vmatprep.subr.mxu0 0.0
          %413 = vmatpush1.msra.mxu0 0.0
          %414 = vmatprep.subr.mxu0 0.0
          %415 = vmatpush1.msra.mxu0 0.0
          %416 = vmatprep.subr.mxu0 0.0
          %417 = vmatpush1.msra.mxu0 0.0
          %418 = vmatprep.subr.mxu0 0.0
          %419 = vmatpush1.msra.mxu0 0.0
          %420 = vmatprep.subr.mxu0 0.0
          %421 = vmatpush1.msra.mxu0 0.0
          %422 = vmatprep.subr.mxu0 0.0
          %423 = vmatpush1.msra.mxu0 0.0
          %424 = vmatprep.subr.mxu0 0.0
          %425 = vmatpush1.msra.mxu0 0.0
          %426 = vmatprep.subr.mxu0 0.0
          %427 = vmatpush1.msra.mxu0 0.0
          %428 = vmatprep.subr.mxu0 0.0
          %429 = vmatpush1.msra.mxu0 0.0
          %430 = vmatprep.subr.mxu0 0.0
          %431 = vmatpush1.msra.mxu0 0.0
          %432 = vmatprep.subr.mxu0 0.0
          %433 = vmatpush1.msra.mxu0 0.0
          %434 = vmatprep.subr.mxu0 0.0
          %435 = vmatpush1.msra.mxu0 0.0
          %436 = vmatprep.subr.mxu0 0.0
          %437 = vmatpush1.msra.mxu0 %v403
          %438 = vmatprep.subr.mxu0 0.0
          %439 = vmatpush1.msra.mxu0 %v402
          %440 = vmatprep.subr.mxu0 0.0
          %441 = vmatpush2.msra.mxu0 0.0
          %442 = vmatprep.subr.mxu0 0.0
          %443 = vmatpush2.msra.mxu0 0.0
          %444 = vmatprep.subr.mxu0 0.0
          %445 = vmatpush2.msra.mxu0 0.0
          %446 = vmatprep.subr.mxu0 0.0
          %447 = vmatpush2.msra.mxu0 0.0
          %448 = vmatprep.subr.mxu0 0.0
          %449 = vmatpush2.msra.mxu0 0.0
          %450 = vmatprep.subr.mxu0 0.0
          %451 = vmatpush2.msra.mxu0 0.0
          %452 = vmatprep.subr.mxu0 0.0
          %453 = vmatpush2.msra.mxu0 0.0
          %454 = vmatprep.subr.mxu0 0.0
          %455 = vmatpush2.msra.mxu0 0.0
          %456 = vmatprep.subr.mxu0 0.0
          %457 = vmatpush2.msra.mxu0 0.0
          %458 = vmatprep.subr.mxu0 0.0
          %459 = vmatpush2.msra.mxu0 0.0
          %460 = vmatprep.subr.mxu0 0.0
          %461 = vmatpush2.msra.mxu0 0.0
          %462 = vmatprep.subr.mxu0 0.0
          %463 = vmatpush2.msra.mxu0 0.0
          %464 = vmatprep.subr.mxu0 0.0
          %465 = vmatpush2.msra.mxu0 0.0
          %466 = vmatprep.subr.mxu0 0.0
          %467 = vmatpush2.msra.mxu0 0.0
          %468 = vmatprep.subr.mxu0 0.0
          %469 = vmatpush2.msra.mxu0 0.0
          %470 = vmatprep.subr.mxu0 0.0
          %471 = vmatpush2.msra.mxu0 0.0
          %472 = vmatprep.mubr.f32.mxu0 0.0
          %473 = vmatmul.mubr.f32.gmra.mxu0 %v406
          %v474 = vpop.f32.mrf.mxu0
          %v475 = vadd.f32 0.0, %v474
          %v476 = vpop.f32.mrf.mxu0
          %477 = vdwg.mxu0
          %vm478 = vcmask 261120
          %479 = vst.msk [vmem:[#allocation2] sm:$0xff] %vm478, %v475
          %vm480 = vcmask 7168
          %481 = vst.msk [vmem:[#allocation3] sm:$0xff] %vm480, -inf
          %482 = vst.msk [vmem:[#allocation4] sm:$0xff] %vm480, 0.0
          %483 = vst.msk [vmem:[#allocation5] sm:$0xff] %vm404, 0.0
        $region68: #{tpu_custom_call.1} parent=43 // pred_fallthru
          _
        %v484 = vld [vmem:[%s341] sm:$0xff]
        %v485 = vld [vmem:[#allocation14] sm:$0xff]
        %v486 = vld [vmem:[#allocation14 + $0x8] sm:$0xff]
        %vm487 = vcmask 130048
        %v489 = vsel %vm487, %v484, 0
        %491 = vmatprep.subr.mxu0 0.0
        %492 = vmatpush1.msra.mxu0 0.0
        %493 = vmatprep.subr.mxu0 0.0
        %494 = vmatpush1.msra.mxu0 0.0
        %495 = vmatprep.subr.mxu0 0.0
        %496 = vmatpush1.msra.mxu0 0.0
        %497 = vmatprep.subr.mxu0 0.0
        %498 = vmatpush1.msra.mxu0 0.0
        %499 = vmatprep.subr.mxu0 0.0
        %500 = vmatpush1.msra.mxu0 0.0
        %501 = vmatprep.subr.mxu0 0.0
        %502 = vmatpush1.msra.mxu0 0.0
        %503 = vmatprep.subr.mxu0 0.0
        %504 = vmatpush1.msra.mxu0 0.0
        %505 = vmatprep.subr.mxu0 0.0
        %506 = vmatpush1.msra.mxu0 0.0
        %507 = vmatprep.subr.mxu0 0.0
        %508 = vmatpush1.msra.mxu0 0.0
        %509 = vmatprep.subr.mxu0 0.0
        %510 = vmatpush1.msra.mxu0 0.0
        %511 = vmatprep.subr.mxu0 0.0
        %512 = vmatpush1.msra.mxu0 0.0
        %513 = vmatprep.subr.mxu0 0.0
        %514 = vmatpush1.msra.mxu0 0.0
        %515 = vmatprep.subr.mxu0 0.0
        %516 = vmatpush1.msra.mxu0 0.0
        %517 = vmatprep.subr.mxu0 0.0
        %518 = vmatpush1.msra.mxu0 0.0
        %519 = vmatprep.subr.mxu0 0.0
        %520 = vmatpush1.msra.mxu0 %v486
        %521 = vmatprep.subr.mxu0 0.0
        %522 = vmatpush1.msra.mxu0 %v485
        %523 = vmatprep.subr.mxu0 0.0
        %524 = vmatpush2.msra.mxu0 0.0
        %525 = vmatprep.subr.mxu0 0.0
        %526 = vmatpush2.msra.mxu0 0.0
        %527 = vmatprep.subr.mxu0 0.0
        %528 = vmatpush2.msra.mxu0 0.0
        %529 = vmatprep.subr.mxu0 0.0
        %530 = vmatpush2.msra.mxu0 0.0
        %531 = vmatprep.subr.mxu0 0.0
        %532 = vmatpush2.msra.mxu0 0.0
        %533 = vmatprep.subr.mxu0 0.0
        %534 = vmatpush2.msra.mxu0 0.0
        %535 = vmatprep.subr.mxu0 0.0
        %536 = vmatpush2.msra.mxu0 0.0
        %537 = vmatprep.subr.mxu0 0.0
        %538 = vmatpush2.msra.mxu0 0.0
        %539 = vmatprep.subr.mxu0 0.0
        %540 = vmatpush2.msra.mxu0 0.0
        %541 = vmatprep.subr.mxu0 0.0
        %542 = vmatpush2.msra.mxu0 0.0
        %543 = vmatprep.subr.mxu0 0.0
        %544 = vmatpush2.msra.mxu0 0.0
        %545 = vmatprep.subr.mxu0 0.0
        %546 = vmatpush2.msra.mxu0 0.0
        %547 = vmatprep.subr.mxu0 0.0
        %548 = vmatpush2.msra.mxu0 0.0
        %549 = vmatprep.subr.mxu0 0.0
        %550 = vmatpush2.msra.mxu0 0.0
        %551 = vmatprep.subr.mxu0 0.0
        %552 = vmatpush2.msra.mxu0 0.0
        %553 = vmatprep.subr.mxu0 0.0
        %554 = vmatpush2.msra.mxu0 0.0
        %555 = vmatprep.mubr.f32.mxu0 0.0
        %556 = vmatmul.mubr.f32.gmra.mxu0 %v489
        %v557 = vpop.f32.mrf.mxu0
        %v558 = vadd.f32 0.0, %v557
        %v559 = vpop.f32.mrf.mxu0
        %560 = vdwg.mxu0
        %v561 = vld [vmem:[%s5] sm:$0x1]
        %v562 = vld [vmem:[%s350] sm:$0xff]
        %v563 = vld [vmem:[#allocation2] sm:$0xff]
        %v565 = vcombine.high %v563, %v563
        %v567 = vunpack.c.l.s4 1966171168
        %v568 = vunpack.c.0.s8 %v567
        %v569 = vlaneseq
        %v570 = vshrl.u32 %v569, 7
        %v571 = vsub.s32 %v568, %v570
        %v572 = vrot.slane %v563, %v571
        %v574 = vunpack.c.l.s4 1966171168
        %v575 = vunpack.c.0.s8 %v574
        %v576 = vlaneseq
        %v577 = vshrl.u32 %v576, 7
        %v578 = vsub.s32 %v575, %v577
        %v579 = vrot.slane %v565, %v578
        %v580 = vcombine.high %v572, %v572
        %v581 = vcombine.high %v579, %v579
        %v583 = vunpack.c.l.s4 1966171168
        %v584 = vunpack.c.0.s8 %v583
        %v585 = vlaneseq
        %v586 = vshrl.u32 %v585, 7
        %v587 = vsub.s32 %v584, %v586
        %v588 = vrot.slane %v572, %v587
        %v590 = vunpack.c.l.s4 1966171168
        %v591 = vunpack.c.0.s8 %v590
        %v592 = vlaneseq
        %v593 = vshrl.u32 %v592, 7
        %v594 = vsub.s32 %v591, %v593
        %v595 = vrot.slane %v579, %v594
        %v597 = vunpack.c.l.s4 1966171168
        %v598 = vunpack.c.0.s8 %v597
        %v599 = vlaneseq
        %v600 = vshrl.u32 %v599, 7
        %v601 = vsub.s32 %v598, %v600
        %v602 = vrot.slane %v580, %v601
        %v604 = vunpack.c.l.s4 1966171168
        %v605 = vunpack.c.0.s8 %v604
        %v606 = vlaneseq
        %v607 = vshrl.u32 %v606, 7
        %v608 = vsub.s32 %v605, %v607
        %v609 = vrot.slane %v581, %v608
        %v610 = vcombine.high %v588, %v588
        %v611 = vcombine.high %v595, %v595
        %v612 = vcombine.high %v602, %v602
        %v613 = vcombine.high %v609, %v609
        %v614 = vlaneseq
        %v615 = vshrl.u32 %v614, 7
        %v616 = vsub.s32 0, %v615
        %v617 = vrot.slane %v588, %v616
        %v618 = vlaneseq
        %v619 = vshrl.u32 %v618, 7
        %v620 = vsub.s32 0, %v619
        %v621 = vrot.slane %v602, %v620
        %v622 = vlaneseq
        %v623 = vshrl.u32 %v622, 7
        %v624 = vsub.s32 0, %v623
        %v625 = vrot.slane %v610, %v624
        %v626 = vlaneseq
        %v627 = vshrl.u32 %v626, 7
        %v628 = vsub.s32 0, %v627
        %v629 = vrot.slane %v612, %v628
        %v630 = vlaneseq
        %v631 = vshrl.u32 %v630, 7
        %v632 = vsub.s32 0, %v631
        %v633 = vrot.slane %v595, %v632
        %v634 = vlaneseq
        %v635 = vshrl.u32 %v634, 7
        %v636 = vsub.s32 0, %v635
        %v637 = vrot.slane %v609, %v636
        %v638 = vlaneseq
        %v639 = vshrl.u32 %v638, 7
        %v640 = vsub.s32 0, %v639
        %v641 = vrot.slane %v611, %v640
        %v642 = vlaneseq
        %v643 = vshrl.u32 %v642, 7
        %v644 = vsub.s32 0, %v643
        %v645 = vrot.slane %v613, %v644
        %v654 = vadd.f32 %v617, %v558
        %v655 = vadd.f32 %v621, %v558
        %v656 = vadd.f32 %v625, %v558
        %v657 = vadd.f32 %v629, %v558
        %v658 = vadd.f32 %v633, %v558
        %v659 = vadd.f32 %v637, %v558
        %v660 = vadd.f32 %v641, %v558
        %v661 = vadd.f32 %v645, %v558
        %v662 = vtanh.pop %v654
        %v663 = vtanh.pop %v655
        %v664 = vtanh.pop %v656
        %v665 = vtanh.pop %v657
        %v666 = vtanh.pop %v658
        %v667 = vtanh.pop %v659
        %v668 = vtanh.pop %v660
        %v669 = vtanh.pop %v661
        %v671 = vlaneseq
        %v672 = vshrl.u32 %v671, 7
        %v673 = vsub.s32 0, %v672
        %v674 = vrot.slane %v561, %v673
        %v676 = vmul.f32 %v662, %v674
        %v677 = vmul.f32 %v663, %v674
        %v678 = vmul.f32 %v664, %v674
        %v679 = vmul.f32 %v665, %v674
        %v680 = vmul.f32 %v666, %v674
        %v681 = vmul.f32 %v667, %v674
        %v682 = vmul.f32 %v668, %v674
        %v683 = vmul.f32 %v669, %v674
        %vm684 = vcmask 261120
        %v685 = vsel %vm684, %v676, 0.0
        %686 = vadd.xlane.f32.xlu0 %v685
        %v687 = vpop.xlane.xlu0 %686
        %v688 = vsel %vm684, %v677, 0.0
        %689 = vadd.xlane.f32.xlu0 %v688
        %v690 = vpop.xlane.xlu0 %689
        %v691 = vsel %vm684, %v678, 0.0
        %692 = vadd.xlane.f32.xlu0 %v691
        %v693 = vpop.xlane.xlu0 %692
        %v694 = vsel %vm684, %v679, 0.0
        %695 = vadd.xlane.f32.xlu0 %v694
        %v696 = vpop.xlane.xlu0 %695
        %v697 = vsel %vm684, %v680, 0.0
        %698 = vadd.xlane.f32.xlu0 %v697
        %v699 = vpop.xlane.xlu0 %698
        %v700 = vsel %vm684, %v681, 0.0
        %701 = vadd.xlane.f32.xlu0 %v700
        %v702 = vpop.xlane.xlu0 %701
        %v703 = vsel %vm684, %v682, 0.0
        %704 = vadd.xlane.f32.xlu0 %v703
        %v705 = vpop.xlane.xlu0 %704
        %v706 = vsel %vm684, %v683, 0.0
        %707 = vadd.xlane.f32.xlu0 %v706
        %v708 = vpop.xlane.xlu0 %707
        %v709 = vld [vmem:[#allocation3] sm:$0xff]
        %v710 = vld [vmem:[#allocation4] sm:$0xff]
        %v711 = vld [vmem:[#allocation5] sm:$0xff]
        %v720 = vlaneseq
        %v721 = vand.u32 %v720, 127
        %v722 = vlaneseq
        %v723 = vshrl.u32 %v722, 7
        %v724 = vsub.s32 %v721, %v723
        %v725 = vrot.slane %v687, %v724
        %v726 = vlaneseq
        %v727 = vshrl.u32 %v726, 7
        %v728 = vsub.s32 %v721, %v727
        %v729 = vrot.slane %v690, %v728
        %v730 = vlaneseq
        %v731 = vshrl.u32 %v730, 7
        %v732 = vsub.s32 %v721, %v731
        %v733 = vrot.slane %v693, %v732
        %v734 = vlaneseq
        %v735 = vshrl.u32 %v734, 7
        %v736 = vsub.s32 %v721, %v735
        %v737 = vrot.slane %v696, %v736
        %v738 = vlaneseq
        %v739 = vshrl.u32 %v738, 7
        %v740 = vsub.s32 %v721, %v739
        %v741 = vrot.slane %v699, %v740
        %v742 = vlaneseq
        %v743 = vshrl.u32 %v742, 7
        %v744 = vsub.s32 %v721, %v743
        %v745 = vrot.slane %v702, %v744
        %v746 = vlaneseq
        %v747 = vshrl.u32 %v746, 7
        %v748 = vsub.s32 %v721, %v747
        %v749 = vrot.slane %v705, %v748
        %v750 = vlaneseq
        %v751 = vshrl.u32 %v750, 7
        %v752 = vsub.s32 %v721, %v751
        %v753 = vrot.slane %v708, %v752
        %vm754 = vcmask 1041409
        %v755 = vsel %vm754, %v729, %v725
        %vm756 = vcmask 1042434
        %v757 = vsel %vm756, %v733, %v755
        %vm758 = vcmask 1043459
        %v759 = vsel %vm758, %v737, %v757
        %vm760 = vcmask 1044484
        %v761 = vsel %vm760, %v741, %v759
        %vm762 = vcmask 1045509
        %v763 = vsel %vm762, %v745, %v761
        %vm764 = vcmask 1046534
        %v765 = vsel %vm764, %v749, %v763
        %vm766 = vcmask 1047559
        %v767 = vsel %vm766, %v753, %v765
        %vm769 = vcmask 64512
        %v770 = vsel %vm769, %v767, -inf
        %771 = vmax.xlane.f32.xlu0 %v770
        %v772 = vpop.xlane.xlu0 %771
        %v773 = vmax.f32 %v709, %v772
        %v774 = vsub.f32 %v709, %v773
        %v775 = vmul.f32 %v774, 1.442695
        %v776 = vpow.pop %v775
        %778 = vset.pattern.permute.xlu0 0
        %779 = vperm.xlu0 %778, %v773
        %v780 = vpop.permute.xlu0 %779
        %v781 = vlaneseq
        %v782 = vshrl.u32 %v781, 7
        %v783 = vsub.s32 0, %v782
        %v784 = vrot.slane %v780, %v783
        %v785 = vlaneseq
        %v786 = vshrl.u32 %v785, 7
        %v787 = vsub.s32 1, %v786
        %v788 = vrot.slane %v780, %v787
        %v789 = vlaneseq
        %v790 = vshrl.u32 %v789, 7
        %v791 = vsub.s32 2, %v790
        %v792 = vrot.slane %v780, %v791
        %v793 = vlaneseq
        %v794 = vshrl.u32 %v793, 7
        %v795 = vsub.s32 3, %v794
        %v796 = vrot.slane %v780, %v795
        %v797 = vlaneseq
        %v798 = vshrl.u32 %v797, 7
        %v799 = vsub.s32 4, %v798
        %v800 = vrot.slane %v780, %v799
        %v801 = vlaneseq
        %v802 = vshrl.u32 %v801, 7
        %v803 = vsub.s32 5, %v802
        %v804 = vrot.slane %v780, %v803
        %v805 = vlaneseq
        %v806 = vshrl.u32 %v805, 7
        %v807 = vsub.s32 6, %v806
        %v808 = vrot.slane %v780, %v807
        %v809 = vlaneseq
        %v810 = vshrl.u32 %v809, 7
        %v811 = vsub.s32 7, %v810
        %v812 = vrot.slane %v780, %v811
        %v821 = vsub.f32 %v687, %v784
        %v822 = vsub.f32 %v690, %v788
        %v823 = vsub.f32 %v693, %v792
        %v824 = vsub.f32 %v696, %v796
        %v825 = vsub.f32 %v699, %v800
        %v826 = vsub.f32 %v702, %v804
        %v827 = vsub.f32 %v705, %v808
        %v828 = vsub.f32 %v708, %v812
        %v829 = vmul.f32 %v821, 1.442695
        %v830 = vpow.pop %v829
        %v831 = vmul.f32 %v822, 1.442695
        %v832 = vpow.pop %v831
        %v833 = vmul.f32 %v823, 1.442695
        %v834 = vpow.pop %v833
        %v835 = vmul.f32 %v824, 1.442695
        %v836 = vpow.pop %v835
        %v837 = vmul.f32 %v825, 1.442695
        %v838 = vpow.pop %v837
        %v839 = vmul.f32 %v826, 1.442695
        %v840 = vpow.pop %v839
        %v841 = vmul.f32 %v827, 1.442695
        %v842 = vpow.pop %v841
        %v843 = vmul.f32 %v828, 1.442695
        %v844 = vpow.pop %v843
        %v845 = vmul.f32 %v776, %v710
        %854 = vset.pattern.permute.xlu0 0
        %855 = vperm.xlu0 %854, %v830
        %v856 = vpop.permute.xlu0 %855
        %857 = vset.pattern.permute.xlu0 0
        %858 = vperm.xlu0 %857, %v832
        %v859 = vpop.permute.xlu0 %858
        %860 = vset.pattern.permute.xlu0 0
        %861 = vperm.xlu0 %860, %v834
        %v862 = vpop.permute.xlu0 %861
        %863 = vset.pattern.permute.xlu0 0
        %864 = vperm.xlu0 %863, %v836
        %v865 = vpop.permute.xlu0 %864
        %866 = vset.pattern.permute.xlu0 0
        %867 = vperm.xlu0 %866, %v838
        %v868 = vpop.permute.xlu0 %867
        %869 = vset.pattern.permute.xlu0 0
        %870 = vperm.xlu0 %869, %v840
        %v871 = vpop.permute.xlu0 %870
        %872 = vset.pattern.permute.xlu0 0
        %873 = vperm.xlu0 %872, %v842
        %v874 = vpop.permute.xlu0 %873
        %875 = vset.pattern.permute.xlu0 0
        %876 = vperm.xlu0 %875, %v844
        %v877 = vpop.permute.xlu0 %876
        %v878 = vlaneseq
        %v879 = vshrl.u32 %v878, 7
        %v880 = vsub.s32 %v721, %v879
        %v881 = vrot.slane %v856, %v880
        %v882 = vlaneseq
        %v883 = vshrl.u32 %v882, 7
        %v884 = vsub.s32 %v721, %v883
        %v885 = vrot.slane %v859, %v884
        %v886 = vlaneseq
        %v887 = vshrl.u32 %v886, 7
        %v888 = vsub.s32 %v721, %v887
        %v889 = vrot.slane %v862, %v888
        %v890 = vlaneseq
        %v891 = vshrl.u32 %v890, 7
        %v892 = vsub.s32 %v721, %v891
        %v893 = vrot.slane %v865, %v892
        %v894 = vlaneseq
        %v895 = vshrl.u32 %v894, 7
        %v896 = vsub.s32 %v721, %v895
        %v897 = vrot.slane %v868, %v896
        %v898 = vlaneseq
        %v899 = vshrl.u32 %v898, 7
        %v900 = vsub.s32 %v721, %v899
        %v901 = vrot.slane %v871, %v900
        %v902 = vlaneseq
        %v903 = vshrl.u32 %v902, 7
        %v904 = vsub.s32 %v721, %v903
        %v905 = vrot.slane %v874, %v904
        %v906 = vlaneseq
        %v907 = vshrl.u32 %v906, 7
        %v908 = vsub.s32 %v721, %v907
        %v909 = vrot.slane %v877, %v908
        %v910 = vsel %vm754, %v885, %v881
        %v911 = vsel %vm756, %v889, %v910
        %v912 = vsel %vm758, %v893, %v911
        %v913 = vsel %vm760, %v897, %v912
        %v914 = vsel %vm762, %v901, %v913
        %v915 = vsel %vm764, %v905, %v914
        %v916 = vsel %vm766, %v909, %v915
        %v918 = vsel %vm769, %v916, 0.0
        %919 = vadd.xlane.f32.xlu0 %v918
        %v920 = vpop.xlane.xlu0 %919
        %v921 = vadd.f32 %v845, %v920
        %vm922 = vcmask 7168
        %923 = vst.msk [vmem:[#allocation4] sm:$0xff] %vm922, %v921
        %925 = vset.pattern.permute.xlu0 0
        %926 = vperm.xlu0 %925, %v776
        %v927 = vpop.permute.xlu0 %926
        %v929 = vmul.f32 %v927, %v711
        %v930 = vsel %vm769, %v916, 0
        %932 = vmatprep.subr.mxu0 0.0
        %933 = vmatpush1.msra.mxu0 0.0
        %934 = vmatprep.subr.mxu0 0.0
        %935 = vmatpush1.msra.mxu0 0.0
        %936 = vmatprep.subr.mxu0 0.0
        %937 = vmatpush1.msra.mxu0 0.0
        %938 = vmatprep.subr.mxu0 0.0
        %939 = vmatpush1.msra.mxu0 0.0
        %940 = vmatprep.subr.mxu0 0.0
        %941 = vmatpush1.msra.mxu0 0.0
        %942 = vmatprep.subr.mxu0 0.0
        %943 = vmatpush1.msra.mxu0 0.0
        %944 = vmatprep.subr.mxu0 0.0
        %945 = vmatpush1.msra.mxu0 0.0
        %946 = vmatprep.subr.mxu0 0.0
        %947 = vmatpush1.msra.mxu0 0.0
        %948 = vmatprep.subr.mxu0 0.0
        %949 = vmatpush1.msra.mxu0 0.0
        %950 = vmatprep.subr.mxu0 0.0
        %951 = vmatpush1.msra.mxu0 0.0
        %952 = vmatprep.subr.mxu0 0.0
        %953 = vmatpush1.msra.mxu0 0.0
        %954 = vmatprep.subr.mxu0 0.0
        %955 = vmatpush1.msra.mxu0 0.0
        %956 = vmatprep.subr.mxu0 0.0
        %957 = vmatpush1.msra.mxu0 0.0
        %958 = vmatprep.subr.mxu0 0.0
        %959 = vmatpush1.msra.mxu0 0.0
        %960 = vmatprep.subr.mxu0 0.0
        %961 = vmatpush1.msra.mxu0 0.0
        %962 = vmatprep.subr.mxu0 0.0
        %963 = vmatpush1.msra.mxu0 %v562
        %964 = vmatprep.subr.mxu0 0.0
        %965 = vmatpush2.msra.mxu0 0.0
        %966 = vmatprep.subr.mxu0 0.0
        %967 = vmatpush2.msra.mxu0 0.0
        %968 = vmatprep.subr.mxu0 0.0
        %969 = vmatpush2.msra.mxu0 0.0
        %970 = vmatprep.subr.mxu0 0.0
        %971 = vmatpush2.msra.mxu0 0.0
        %972 = vmatprep.subr.mxu0 0.0
        %973 = vmatpush2.msra.mxu0 0.0
        %974 = vmatprep.subr.mxu0 0.0
        %975 = vmatpush2.msra.mxu0 0.0
        %976 = vmatprep.subr.mxu0 0.0
        %977 = vmatpush2.msra.mxu0 0.0
        %978 = vmatprep.subr.mxu0 0.0
        %979 = vmatpush2.msra.mxu0 0.0
        %980 = vmatprep.subr.mxu0 0.0
        %981 = vmatpush2.msra.mxu0 0.0
        %982 = vmatprep.subr.mxu0 0.0
        %983 = vmatpush2.msra.mxu0 0.0
        %984 = vmatprep.subr.mxu0 0.0
        %985 = vmatpush2.msra.mxu0 0.0
        %986 = vmatprep.subr.mxu0 0.0
        %987 = vmatpush2.msra.mxu0 0.0
        %988 = vmatprep.subr.mxu0 0.0
        %989 = vmatpush2.msra.mxu0 0.0
        %990 = vmatprep.subr.mxu0 0.0
        %991 = vmatpush2.msra.mxu0 0.0
        %992 = vmatprep.subr.mxu0 0.0
        %993 = vmatpush2.msra.mxu0 0.0
        %994 = vmatprep.subr.mxu0 0.0
        %995 = vmatpush2.msra.mxu0 0.0
        %996 = vmatprep.mubr.f32.mxu0 0.0
        %997 = vmatmul.mubr.f32.gmra.mxu0 %v930
        %v998 = vpop.f32.mrf.mxu0
        %v999 = vadd.f32 0.0, %v998
        %v1000 = vpop.f32.mrf.mxu0
        %1001 = vdwg.mxu0
        %v1002 = vadd.f32 %v929, %v999
        %1003 = vst.msk [vmem:[#allocation5] sm:$0xff] %vm487, %v1002
        %1004 = vst.msk [vmem:[#allocation3] sm:$0xff] %vm922, %v773
        // Predicated region
        $region69: #{tpu_custom_call.1} parent=43 // pred_check
          %p1005 = pneg %p397
        $region70: #{tpu_custom_call.1} parent=43 // pred_check_branch
          %1007 = sbr.rel (%p1005) target = $region72
        $region71: #{tpu_custom_call.1} parent=43 // pred_region
          %v1008 = vld [vmem:[#allocation5] sm:$0xff]
          %v1009 = vld [vmem:[#allocation4] sm:$0xff]
          %1011 = vset.pattern.permute.xlu0 0
          %1012 = vperm.xlu0 %1011, %v1009
          %v1013 = vpop.permute.xlu0 %1012
          %v1015 = vrcp.pop %v1013
          %v1016 = vmul.f32 %v1008, %v1015
          %1017 = vst.msk [vmem:[%s396] sm:$0xff] %vm487, %v1016
        $region72: #{tpu_custom_call.1} parent=43 // pred_fallthru
          _
        %s1018 = sand.u32 %s203, 1
        %s1019 = scalar_lea.sflag [#allocation8], %s1018
        %s1020 = sand.u32 %s203, 1
        %s1021 = smul.addr %s1020, 8
        %s1022 = scalar_lea.vmem [#allocation15], %s1021
        // Predicated region
        $region73: #{tpu_custom_call.1} parent=43 // pred_check
          %p1023 = pneg %p213
        $region74: #{tpu_custom_call.1} parent=43 // pred_check_branch
          %1025 = sbr.rel (%p1023) target = $region76
        $region75: #{tpu_custom_call.1} parent=43 // pred_region
          %s1027 = ssub.s32 128, 128
          %1028 = vsyncadd %s1019, %s1027
          %s1029 = sadd.s32 %s33, %s32
          %s1030 = smul.addr %s1029, 128
          %s1031 = scalar_lea.hbm %s6, %s1030
          %s1033 = sshll.u32 %s1022, 4
          %s1034 = int_to_ptr.vmem [resolvable:$true] %s1033
          %1036 = dma.vmem_to_hbm [thread:$0]  %s1034, 128, %s1031, %s1019
        $region76: #{tpu_custom_call.1} parent=43 // pred_fallthru
          _
      $region44: #{tpu_custom_call.1} parent=5 // pred_fallthru
        _
      %p1037 = scmp.le.s32.totalorder 2, %s22
      // Predicated region
      $region77: #{tpu_custom_call.1} parent=5 // pred_check
        %p1038 = pneg %p1037
      $region78: #{tpu_custom_call.1} parent=5 // pred_check_branch
        %1040 = sbr.rel (%p1038) target = $region80
      $region79: #{tpu_custom_call.1} parent=5 // pred_region
        %s1041 = ssub.s32 %s22, 2
        // Predicated region
        $region81: #{tpu_custom_call.1} parent=79 // pred_check
          %p1042 = pneg %p219
        $region82: #{tpu_custom_call.1} parent=79 // pred_check_branch
          %1044 = sbr.rel (%p1042) target = $region84
        $region83: #{tpu_custom_call.1} parent=79 // pred_region
          %s1045 = sand.u32 %s204, 1
          %s1046 = scalar_lea.sflag [#allocation8], %s1045
          %s1047 = sand.u32 %s204, 1
          %s1048 = smul.addr %s1047, 8
          %s1049 = scalar_lea.vmem [#allocation15], %s1048
          %1050 = dma.done %s1046, 128
        $region84: #{tpu_custom_call.1} parent=79 // pred_fallthru
          _
      $region80: #{tpu_custom_call.1} parent=5 // pred_fallthru
        _
    $region6: #{tpu_custom_call.1} parent=1 // loop_footer
      %s26 = sadd.s32 1, %s22
    $region7: #{tpu_custom_call.1} parent=1 // loop_footer_branch
      %21 = sbr.rel target = $region3
    $region8: #{tpu_custom_call.1} parent=1 // loop_exit
      _
    %1051 = vsyncpa [#allocation7], 1
    %s1052 = scalar_lea.sflag [#allocation7], 1
    %1053 = vsyncpa %s1052, 1
    %1054 = vsyncpa [#allocation10], 1
    %s1055 = scalar_lea.sflag [#allocation10], 1
    %1056 = vsyncpa %s1055, 1
    %1057 = vsyncpa [#allocation13], 1
    %1058 = vsyncpa [#allocation8], 1
    %s1059 = scalar_lea.sflag [#allocation8], 1
    %1060 = vsyncpa %s1059, 1

</llo_original>
